<compile_context>
chip_gen: v7x
topology: tpu7x:2x2x1
jax: 0.10.0
libtpu: 0.0.40
codegen_flags: <defaults>
</compile_context>

<pallas_src>
import functools

import jax
import jax.numpy as jnp
from jax.experimental import pallas as pl
from jax.experimental.pallas import tpu as pltpu

_EPS = 1e-5  # BatchNorm2d default


def _vmem_limit_bytes():
    # Per-generation scoped-VMEM budget with headroom below physical capacity.
    cap = 64 * 1024 * 1024  # conservative default (v7x physical per-TC VMEM)
    try:
        info = pltpu.get_tpu_info()
        cap = int(getattr(info, "vmem_capacity_bytes", cap))
    except Exception:
        pass
    return min(int(cap * 3 // 4), 96 * 1024 * 1024)


# ----------------------------- fused (chunk-resident) path -----------------------------

def _fused_kernel(count, x_ref, w_ref, b_ref, o_ref):
    # x_ref: (chunk_size, C, HW) = one whole ghost batch resident in VMEM.
    x = x_ref[...].astype(jnp.float32)
    inv_count = 1.0 / count
    s = jnp.sum(x, axis=2, keepdims=True).sum(axis=0, keepdims=True)       # (1, C, 1)
    sq = jnp.sum(x * x, axis=2, keepdims=True).sum(axis=0, keepdims=True)  # (1, C, 1)
    mean = s * inv_count
    # TODO(synk): shifted (centered) variance if inputs can carry a large DC offset.
    var = jnp.maximum(sq * inv_count - mean * mean, 0.0)
    inv = jax.lax.rsqrt(var + _EPS)
    scale = w_ref[...] * inv                 # (1, C, 1); weight/bias pre-cast to f32
    shift = b_ref[...] - mean * scale
    o_ref[...] = (x * scale + shift).astype(o_ref.dtype)


# ----------------------------- two-pass streaming path -----------------------------

def _stats_kernel(x_ref, sum_ref, sumsq_ref):
    # x_ref: (bn_tile, C, hw_tile) tile of one ghost batch.  Accumulate per-channel
    # sum / sum-of-squares into the per-chunk (1, C, 1) f32 accumulators.
    t = pl.program_id(1)
    h = pl.program_id(2)

    @pl.when(jnp.logical_and(t == 0, h == 0))
    def _():
        sum_ref[...] = jnp.zeros_like(sum_ref)
        sumsq_ref[...] = jnp.zeros_like(sumsq_ref)

    x = x_ref[...].astype(jnp.float32)
    sum_ref[...] += jnp.sum(x, axis=2, keepdims=True).sum(axis=0, keepdims=True)
    sumsq_ref[...] += jnp.sum(x * x, axis=2, keepdims=True).sum(axis=0, keepdims=True)


def _norm_kernel(count, sum_ref, sumsq_ref, w_ref, b_ref, x_ref, o_ref):
    # Epilogue folded in: derive per-chunk scale/shift from the (tiny) sums each tile,
    # then apply the fused affine.  The (1, C, 1) math is negligible per grid step.
    inv_count = 1.0 / count
    mean = sum_ref[...] * inv_count
    var = jnp.maximum(sumsq_ref[...] * inv_count - mean * mean, 0.0)
    inv = jax.lax.rsqrt(var + _EPS)
    scale = w_ref[...] * inv
    shift = b_ref[...] - mean * scale
    o_ref[...] = (x_ref[...].astype(jnp.float32) * scale + shift).astype(o_ref.dtype)


def _pick_tiles(chunk_size, C, HW, itemsize, target_bytes):
    # Pick (bn_tile, hw_tile): bn_tile divides chunk_size; hw_tile is HW itself or a
    # 128-multiple divisor of HW (BlockSpec lane constraint).  Largest block <= target.
    hw_cands = [HW]
    if HW % 128 == 0:
        hw_cands += [d for d in range(128, HW, 128) if HW % d == 0]
    min_hw = 128 if HW % 128 == 0 else HW
    best = (1, min_hw)
    best_bytes = -1
    for hw in hw_cands:
        for bn in range(1, chunk_size + 1):
            if chunk_size % bn:
                continue
            blk = bn * C * hw * itemsize
            if blk <= target_bytes and blk > best_bytes:
                best_bytes = blk
                best = (bn, hw)
    return best


def ghost_batch_norm(x, weight, bias, chunk_size, *, force_two_pass=False):
    N, C, H, W = x.shape
    assert N % chunk_size == 0, "chunk_size must evenly divide the batch dim"  # TODO(synk): ragged last chunk
    num_chunks = N // chunk_size
    HW = H * W
    itemsize = x.dtype.itemsize

    x3 = x.reshape(N, C, HW)                              # free view, stays NCHW order
    w3 = weight.astype(jnp.float32).reshape(1, C, 1)
    b3 = bias.astype(jnp.float32).reshape(1, C, 1)
    count = float(chunk_size * HW)

    vmem_limit = _vmem_limit_bytes()

    # ---- fused single-pass path: whole ghost batch resident in VMEM ----
    chunk_bytes = chunk_size * C * HW * itemsize
    f32_bytes = chunk_size * C * HW * 4
    # 2x in + 2x out (double-buffered) + f32 temporaries margin + slack.
    fused_need = 4 * chunk_bytes + (2 if itemsize < 4 else 1) * f32_bytes + (2 << 20)
    if (not force_two_pass) and fused_need <= vmem_limit:
        out3 = pl.pallas_call(
            functools.partial(_fused_kernel, count),
            out_shape=jax.ShapeDtypeStruct((N, C, HW), x.dtype),
            grid=(num_chunks,),
            in_specs=[
                pl.BlockSpec((chunk_size, C, HW), lambda c: (c, 0, 0)),
                pl.BlockSpec((1, C, 1), lambda c: (0, 0, 0)),
                pl.BlockSpec((1, C, 1), lambda c: (0, 0, 0)),
            ],
            out_specs=pl.BlockSpec((chunk_size, C, HW), lambda c: (c, 0, 0)),
            compiler_params=pltpu.CompilerParams(
                dimension_semantics=("parallel",),   # chunks shard across TCs on v7x
                vmem_limit_bytes=vmem_limit,
            ),
        )(x3, w3, b3)
        return out3.reshape(N, C, H, W)

    # ---- two-pass streaming path ----
    target_block_bytes = vmem_limit // 6   # 2x in + 2x out double-buffered + margin
    bn_tile, hw_tile = _pick_tiles(chunk_size, C, HW, itemsize, target_block_bytes)
    num_row_tiles = chunk_size // bn_tile
    num_hw_tiles = HW // hw_tile

    x_spec = pl.BlockSpec(
        (bn_tile, C, hw_tile), lambda c, t, h: (c * num_row_tiles + t, 0, h))
    chunk_vec_spec = pl.BlockSpec((1, C, 1), lambda c, t, h: (c, 0, 0))
    bcast_vec_spec = pl.BlockSpec((1, C, 1), lambda c, t, h: (0, 0, 0))

    # pass 1: per-chunk, per-channel sum / sum-of-squares (f32 accumulators)
    sums, sumsqs = pl.pallas_call(
        _stats_kernel,
        out_shape=(
            jax.ShapeDtypeStruct((num_chunks, C, 1), jnp.float32),
            jax.ShapeDtypeStruct((num_chunks, C, 1), jnp.float32),
        ),
        grid=(num_chunks, num_row_tiles, num_hw_tiles),
        in_specs=[x_spec],
        out_specs=(chunk_vec_spec, chunk_vec_spec),
        compiler_params=pltpu.CompilerParams(
            dimension_semantics=("parallel", "arbitrary", "arbitrary"),
            vmem_limit_bytes=vmem_limit,
        ),
    )(x3)

    # pass 2: y = x * scale + shift, scale/shift derived in-kernel (epilogue folded in)
    out3 = pl.pallas_call(
        functools.partial(_norm_kernel, count),
        out_shape=jax.ShapeDtypeStruct((N, C, HW), x.dtype),
        grid=(num_chunks, num_row_tiles, num_hw_tiles),
        in_specs=[chunk_vec_spec, chunk_vec_spec, bcast_vec_spec, bcast_vec_spec, x_spec],
        out_specs=x_spec,
        compiler_params=pltpu.CompilerParams(
            dimension_semantics=("parallel", "parallel", "parallel"),
            vmem_limit_bytes=vmem_limit,
        ),
    )(sums, sumsqs, w3, b3, x3)

    return out3.reshape(N, C, H, W)


def _reference(x, weight, bias, chunk_size):
    # pure-JAX reference matching torch.split + BatchNorm2d(train) + cat
    N, C, H, W = x.shape
    chunks = []
    for s in range(0, N, chunk_size):
        xc = x[s:s + chunk_size].astype(jnp.float32)
        mean = jnp.mean(xc, axis=(0, 2, 3), keepdims=True)
        var = jnp.mean((xc - mean) ** 2, axis=(0, 2, 3), keepdims=True)
        y = (xc - mean) / jnp.sqrt(var + _EPS)
        y = y * weight.reshape(1, C, 1, 1) + bias.reshape(1, C, 1, 1)
        chunks.append(y.astype(x.dtype))
    return jnp.concatenate(chunks, axis=0)


if __name__ == "__main__":
    key = jax.random.PRNGKey(0)
    N, C, H, W = 4, 4, 16, 16
    chunk_size = 2  # ghost-batch size (module default is 128; small for the demo)

    x = jax.random.normal(key, (N, C, H, W), dtype=jnp.float32)
    # BatchNorm2d params: shape (num_features,). Deterministic, non-trivial init.
    weight = 1.0 + 0.1 * jnp.arange(C, dtype=jnp.float32)
    bias = 0.01 * jnp.arange(C, dtype=jnp.float32)

    ref = _reference(x, weight, bias, chunk_size)

    # Fused chunk-resident path (default for small/medium chunk slabs).
    out_fused = jax.block_until_ready(ghost_batch_norm(x, weight, bias, chunk_size))
    assert out_fused.shape == (N, C, H, W)
    assert jnp.allclose(out_fused, ref, atol=5e-5, rtol=5e-5), float(
        jnp.max(jnp.abs(out_fused - ref)))

    # Two-pass streaming fallback (used when a chunk slab exceeds the VMEM budget).
    out_stream = jax.block_until_ready(
        ghost_batch_norm(x, weight, bias, chunk_size, force_two_pass=True))
    assert jnp.allclose(out_stream, ref, atol=5e-5, rtol=5e-5), float(
        jnp.max(jnp.abs(out_stream - ref)))

    print("KERNEL_OK")
</pallas_src>

<mosaic_0001>
module attributes {stable_mosaic.version = 11 : i64} {
  func.func @_fused_kernel(%arg0: i32, %arg1: memref<2x4x256xf32, #tpu.memory_space<vmem>>, %arg2: memref<1x4x1xf32, #tpu.memory_space<vmem>>, %arg3: memref<1x4x1xf32, #tpu.memory_space<vmem>>, %arg4: memref<2x4x256xf32, #tpu.memory_space<vmem>>) attributes {dimension_semantics = [#tpu.dimension_semantics<parallel>], iteration_bounds = array<i64: 2>, scalar_prefetch = 0 : i64, scratch_operands = 0 : i64, tpu.core_type = #tpu.core_type<tc>, window_params = [{transform_indices = @transform_0, window_bounds = array<i64: 2, 4, 256>}, {pipeline_mode = #tpu.pipeline_mode<synchronous>, transform_indices = @transform_1, window_bounds = array<i64: 1, 4, 1>}, {pipeline_mode = #tpu.pipeline_mode<synchronous>, transform_indices = @transform_2, window_bounds = array<i64: 1, 4, 1>}, {transform_indices = @transform_3, window_bounds = array<i64: 2, 4, 256>}]} {
    %c0 = arith.constant 0 : index
    %c0_0 = arith.constant 0 : index
    %c0_1 = arith.constant 0 : index
    %0 = vector.load %arg1[%c0, %c0_0, %c0_1] : memref<2x4x256xf32, #tpu.memory_space<vmem>>, vector<2x4x256xf32>
    %cst = arith.constant dense<0.000000e+00> : vector<2x4xf32>
    %1 = vector.multi_reduction <add>, %0, %cst [2] : vector<2x4x256xf32> to vector<2x4xf32>
    %2 = vector.shape_cast %1 : vector<2x4xf32> to vector<2x4x1xf32>
    %cst_2 = arith.constant dense<0.000000e+00> : vector<4x1xf32>
    %3 = vector.multi_reduction <add>, %2, %cst_2 [0] : vector<2x4x1xf32> to vector<4x1xf32>
    %4 = vector.shape_cast %3 : vector<4x1xf32> to vector<1x4x1xf32>
    %5 = arith.mulf %0, %0 : vector<2x4x256xf32>
    %cst_3 = arith.constant dense<0.000000e+00> : vector<2x4xf32>
    %6 = vector.multi_reduction <add>, %5, %cst_3 [2] : vector<2x4x256xf32> to vector<2x4xf32>
    %7 = vector.shape_cast %6 : vector<2x4xf32> to vector<2x4x1xf32>
    %cst_4 = arith.constant dense<0.000000e+00> : vector<4x1xf32>
    %8 = vector.multi_reduction <add>, %7, %cst_4 [0] : vector<2x4x1xf32> to vector<4x1xf32>
    %9 = vector.shape_cast %8 : vector<4x1xf32> to vector<1x4x1xf32>
    %cst_5 = arith.constant 0.001953125 : f32
    %10 = vector.broadcast %cst_5 : f32 to vector<1x4x1xf32>
    %11 = arith.mulf %4, %10 : vector<1x4x1xf32>
    %cst_6 = arith.constant 0.001953125 : f32
    %12 = vector.broadcast %cst_6 : f32 to vector<1x4x1xf32>
    %13 = arith.mulf %9, %12 : vector<1x4x1xf32>
    %14 = arith.mulf %11, %11 : vector<1x4x1xf32>
    %15 = arith.subf %13, %14 : vector<1x4x1xf32>
    %cst_7 = arith.constant 0.000000e+00 : f32
    %16 = vector.broadcast %cst_7 : f32 to vector<1x4x1xf32>
    %17 = arith.maximumf %15, %16 : vector<1x4x1xf32>
    %cst_8 = arith.constant 9.99999974E-6 : f32
    %18 = vector.broadcast %cst_8 : f32 to vector<1x4x1xf32>
    %19 = arith.addf %17, %18 : vector<1x4x1xf32>
    %20 = math.rsqrt %19 : vector<1x4x1xf32>
    %c0_9 = arith.constant 0 : index
    %c0_10 = arith.constant 0 : index
    %c0_11 = arith.constant 0 : index
    %21 = vector.load %arg2[%c0_9, %c0_10, %c0_11] : memref<1x4x1xf32, #tpu.memory_space<vmem>>, vector<1x4x1xf32>
    %22 = arith.mulf %21, %20 : vector<1x4x1xf32>
    %c0_12 = arith.constant 0 : index
    %c0_13 = arith.constant 0 : index
    %c0_14 = arith.constant 0 : index
    %23 = vector.load %arg3[%c0_12, %c0_13, %c0_14] : memref<1x4x1xf32, #tpu.memory_space<vmem>>, vector<1x4x1xf32>
    %24 = arith.mulf %11, %22 : vector<1x4x1xf32>
    %25 = arith.subf %23, %24 : vector<1x4x1xf32>
    %26 = vector.broadcast %22 : vector<1x4x1xf32> to vector<2x4x256xf32>
    %27 = arith.mulf %0, %26 : vector<2x4x256xf32>
    %28 = vector.broadcast %25 : vector<1x4x1xf32> to vector<2x4x256xf32>
    %29 = arith.addf %27, %28 : vector<2x4x256xf32>
    %c0_15 = arith.constant 0 : index
    %c0_16 = arith.constant 0 : index
    %c0_17 = arith.constant 0 : index
    %30 = vector.load %arg4[%c0_15, %c0_16, %c0_17] : memref<2x4x256xf32, #tpu.memory_space<vmem>>, vector<2x4x256xf32>
    tpu.vector_store %arg4[%c0_15, %c0_16, %c0_17], %29 {strides = array<i32>} : memref<2x4x256xf32, #tpu.memory_space<vmem>>, vector<2x4x256xf32>,
    return
  }
  func.func @transform_0(%arg0: i32) -> (i32, i32, i32) {
    %c0_i32 = arith.constant 0 : i32
    %c0_i32_0 = arith.constant 0 : i32
    %c0_i32_1 = arith.constant 0 : i32
    return %arg0, %c0_i32, %c0_i32_0 : i32, i32, i32
  }
  func.func @transform_1(%arg0: i32) -> (i32, i32, i32) {
    %c0_i32 = arith.constant 0 : i32
    %c0_i32_0 = arith.constant 0 : i32
    %c0_i32_1 = arith.constant 0 : i32
    %c0_i32_2 = arith.constant 0 : i32
    return %c0_i32, %c0_i32_0, %c0_i32_1 : i32, i32, i32
  }
  func.func @transform_2(%arg0: i32) -> (i32, i32, i32) {
    %c0_i32 = arith.constant 0 : i32
    %c0_i32_0 = arith.constant 0 : i32
    %c0_i32_1 = arith.constant 0 : i32
    %c0_i32_2 = arith.constant 0 : i32
    return %c0_i32, %c0_i32_0, %c0_i32_1 : i32, i32, i32
  }
  func.func @transform_3(%arg0: i32) -> (i32, i32, i32) {
    %c0_i32 = arith.constant 0 : i32
    %c0_i32_0 = arith.constant 0 : i32
    %c0_i32_1 = arith.constant 0 : i32
    return %arg0, %c0_i32, %c0_i32_0 : i32, i32, i32
  }
}

</mosaic_0001>

<llo_original>
// kernel: tpu_custom_call.1
$region0: #{tpu_custom_call.1}
  #allocation0 [shape = 'u32[]', space=smem, size = 0x4, offset = 0x4, fixed_abs, tag = 'smem constant byte address 0x4 - core index']
  #allocation1 [shape = 'u32[144,128]{1,0:T(1,128)}', space=vmem, size = 0x12000, scoped, tag = 'internal scratch']
  %s0 = inlined_call_operand.hbm [shape: f32[4,4,256], index: 0, kind: input, shape index: {}]
  %s1 = inlined_call_operand.vmem [shape: f32[1,4,1], index: 1, kind: input, shape index: {}]
  %s2 = inlined_call_operand.vmem [shape: f32[1,4,1], index: 2, kind: input, shape index: {}]
  %s3 = inlined_call_operand.hbm [shape: f32[4,4,256], index: 3, kind: output, shape index: {}]
  %s4 = sld [smem:[#allocation0]]
  $region49: #{tpu_custom_call.1} parent=0
    _
  %s6 = ssub.s32 1, %s4
  %s7 = scalar_select 0, %s6, %s4
  $region1: #{tpu_custom_call.1} parent=0
    #allocation2 [shape = 'u8[16384]{0}', space=vmem, size = 0x4000, scoped, tag = 'input window, operand 0']
    #allocation3 [shape = 's32[2]{0}', space=sflag, size = 0x8, scoped, tag = 'scoped memory for tpu_custom_call.1']
    #allocation4 [shape = 's32[2]{0}', space=sflag, size = 0x8, scoped, tag = 'scoped memory for tpu_custom_call.1']
    #allocation5 [shape = 'u8[16384]{0}', space=vmem, size = 0x4000, scoped, tag = 'output window, operand 0']
    %8 = vsyncpa [#allocation3], 0
    %s9 = scalar_lea.sflag [#allocation3], 1
    %10 = vsyncpa %s9, 0
    %11 = vsyncpa [#allocation4], 0
    %s12 = scalar_lea.sflag [#allocation4], 1
    %13 = vsyncpa %s12, 0
    loop: start=0, step=1, limit=4
    $region2: #{tpu_custom_call.1} parent=1 // loop_pre_header
      _
    $region3: #{tpu_custom_call.1} parent=1 // loop_header
      %s15 = sphi 0, %s19
      %p16 = scmp.ge.s32.totalorder %s15, 4
      %s25 = sphi 0, %s27
      %s28 = sphi 0, %s25
      %s29 = sphi 0, %s28
      %s45 = sphi 0, %s29
      %s49 = sphi 0, %s49
      %s51 = sphi 0, %s49
      %s52 = sphi 0, %s51
      %s66 = sphi 0, %s52
      %s70 = sphi 0, %s70
      %s72 = sphi 0, %s70
      %s73 = sphi 0, %s72
      %s87 = sphi 0, %s73
      %s93 = sphi 0, %s95
      %s96 = sphi 0, %s93
      %s97 = sphi 0, %s96
      %s113 = sphi 0, %s97
    $region4: #{tpu_custom_call.1} parent=1 // loop_header_branch
      %18 = sbr.rel (%p16) target = $region8
    $region5: #{tpu_custom_call.1} parent=1 // loop_body
      %s20 = ssub.s32 %s15, 1
      %s21 = ssub.s32 %s15, 2
      %s22 = sadd.s32 %s15, 1
      %s23 = ssub.s32 %s15, %s22
      %p24 = scmp.eq.s32.totalorder %s23, 0
      %s26 = sadd.s32 %s25, 1
      %s27 = scalar_select %p24, %s25, %s26
      %p30 = pneg %p24
      %p31 = scmp.eq.s32.totalorder %s15, 1
      %p32 = por %p30, %p31
      %p33 = scmp.ne.s32.totalorder %s25, %s28
      %p34 = scmp.eq.s32.totalorder %s15, 0
      %p35 = por %p33, %p34
      %p36 = scmp.ne.s32.totalorder %s25, %s28
      %p37 = scmp.eq.s32.totalorder %s20, 1
      %p38 = por %p36, %p37
      %p39 = scmp.ne.s32.totalorder %s28, %s29
      %p40 = scmp.eq.s32.totalorder %s20, 0
      %p41 = por %p39, %p40
      %p42 = scmp.ne.s32.totalorder %s28, %s29
      %p43 = scmp.eq.s32.totalorder %s21, 1
      %p44 = por %p42, %p43
      %p46 = scmp.ne.s32.totalorder %s29, %s45
      %p47 = scmp.eq.s32.totalorder %s21, 0
      %p48 = por %p46, %p47
      %s50 = sadd.s32 %s49, 1
      %p53 = scmp.eq.s32.totalorder %s15, 1
      %p54 = scmp.ne.s32.totalorder %s49, %s51
      %p55 = scmp.eq.s32.totalorder %s15, 0
      %p56 = por %p54, %p55
      %p57 = scmp.ne.s32.totalorder %s49, %s51
      %p58 = scmp.eq.s32.totalorder %s20, 1
      %p59 = por %p57, %p58
      %p60 = scmp.ne.s32.totalorder %s51, %s52
      %p61 = scmp.eq.s32.totalorder %s20, 0
      %p62 = por %p60, %p61
      %p63 = scmp.ne.s32.totalorder %s51, %s52
      %p64 = scmp.eq.s32.totalorder %s21, 1
      %p65 = por %p63, %p64
      %p67 = scmp.ne.s32.totalorder %s52, %s66
      %p68 = scmp.eq.s32.totalorder %s21, 0
      %p69 = por %p67, %p68
      %s71 = sadd.s32 %s70, 1
      %p74 = scmp.eq.s32.totalorder %s15, 1
      %p75 = scmp.ne.s32.totalorder %s70, %s72
      %p76 = scmp.eq.s32.totalorder %s15, 0
      %p77 = por %p75, %p76
      %p78 = scmp.ne.s32.totalorder %s70, %s72
      %p79 = scmp.eq.s32.totalorder %s20, 1
      %p80 = por %p78, %p79
      %p81 = scmp.ne.s32.totalorder %s72, %s73
      %p82 = scmp.eq.s32.totalorder %s20, 0
      %p83 = por %p81, %p82
      %p84 = scmp.ne.s32.totalorder %s72, %s73
      %p85 = scmp.eq.s32.totalorder %s21, 1
      %p86 = por %p84, %p85
      %p88 = scmp.ne.s32.totalorder %s73, %s87
      %p89 = scmp.eq.s32.totalorder %s21, 0
      %p90 = por %p88, %p89
      %s91 = ssub.s32 %s15, %s22
      %p92 = scmp.eq.s32.totalorder %s91, 0
      %s94 = sadd.s32 %s93, 1
      %s95 = scalar_select %p92, %s93, %s94
      %p98 = pneg %p92
      %p99 = scmp.eq.s32.totalorder %s15, 1
      %p100 = por %p98, %p99
      %p101 = scmp.ne.s32.totalorder %s93, %s96
      %p102 = scmp.eq.s32.totalorder %s15, 0
      %p103 = por %p101, %p102
      %p104 = scmp.ne.s32.totalorder %s93, %s96
      %p105 = scmp.eq.s32.totalorder %s20, 1
      %p106 = por %p104, %p105
      %p107 = scmp.ne.s32.totalorder %s96, %s97
      %p108 = scmp.eq.s32.totalorder %s20, 0
      %p109 = por %p107, %p108
      %p110 = scmp.ne.s32.totalorder %s96, %s97
      %p111 = scmp.eq.s32.totalorder %s21, 1
      %p112 = por %p110, %p111
      %p114 = scmp.ne.s32.totalorder %s97, %s113
      %p115 = scmp.eq.s32.totalorder %s21, 0
      %p116 = por %p114, %p115
      %p117 = scmp.le.s32.totalorder 1, %s15
      %p118 = scmp.lt.s32.totalorder %s15, 3
      %p119 = pnand %p117, %p118
      %p120 = pneg %p119
      // Predicated region
      $region9: #{tpu_custom_call.1} parent=5 // pred_check
        _
      $region10: #{tpu_custom_call.1} parent=5 // pred_check_branch
        %122 = sbr.rel (%p119) target = $region12
      $region11: #{tpu_custom_call.1} parent=5 // pred_region
        %s123 = ssub.s32 %s15, 1
        // Predicated region
        $region13: #{tpu_custom_call.1} parent=11 // pred_check
          %p124 = pneg %p62
        $region14: #{tpu_custom_call.1} parent=11 // pred_check_branch
          %126 = sbr.rel (%p124) target = $region16
        $region15: #{tpu_custom_call.1} parent=11 // pred_region
          _
        $region16: #{tpu_custom_call.1} parent=11 // pred_fallthru
          _
        // Predicated region
        $region17: #{tpu_custom_call.1} parent=11 // pred_check
          %p127 = pneg %p83
        $region18: #{tpu_custom_call.1} parent=11 // pred_check_branch
          %129 = sbr.rel (%p127) target = $region20
        $region19: #{tpu_custom_call.1} parent=11 // pred_region
          _
        $region20: #{tpu_custom_call.1} parent=11 // pred_fallthru
          _
      $region12: #{tpu_custom_call.1} parent=5 // pred_fallthru
        _
      %p130 = scmp.lt.s32.totalorder %s15, 2
      // Predicated region
      $region21: #{tpu_custom_call.1} parent=5 // pred_check
        %p131 = pneg %p130
      $region22: #{tpu_custom_call.1} parent=5 // pred_check_branch
        %133 = sbr.rel (%p131) target = $region24
      $region23: #{tpu_custom_call.1} parent=5 // pred_region
        // Predicated region
        $region25: #{tpu_custom_call.1} parent=23 // pred_check
          %p134 = pneg %p35
        $region26: #{tpu_custom_call.1} parent=23 // pred_check_branch
          %136 = sbr.rel (%p134) target = $region28
        $region27: #{tpu_custom_call.1} parent=23 // pred_region
          %s137 = sand.u32 %s25, 1
          %s138 = scalar_lea.sflag [#allocation3], %s137
          %s139 = sand.u32 %s25, 1
          %s140 = smul.addr %s139, 16
          %s141 = scalar_lea.vmem [#allocation2], %s140
          %s142 = smul.u32 2, %s15
          %s144 = ssub.s32 256, 256
          %145 = vsyncadd %s138, %s144
          %s146 = smul.addr %s142, 2
          %s147 = smul.addr %s146, 64
          %s148 = scalar_lea.hbm %s0, %s147
          %s149 = sshll.u32 %s141, 4
          %s150 = int_to_ptr.vmem [resolvable:$true] %s149
          %155 = dma.hbm_to_vmem [thread:$0]  %s148, 256, %s150, %s138, 128, 128, 8
        $region28: #{tpu_custom_call.1} parent=23 // pred_fallthru
          _
      $region24: #{tpu_custom_call.1} parent=5 // pred_fallthru
        _
      %p156 = scmp.le.s32.totalorder 1, %s15
      %p157 = scmp.lt.s32.totalorder %s15, 3
      %p158 = pnand %p156, %p157
      %p159 = pneg %p158
      // Predicated region
      $region29: #{tpu_custom_call.1} parent=5 // pred_check
        _
      $region30: #{tpu_custom_call.1} parent=5 // pred_check_branch
        %161 = sbr.rel (%p158) target = $region32
      $region31: #{tpu_custom_call.1} parent=5 // pred_region
        %s162 = ssub.s32 %s15, 1
        %s163 = sand.u32 %s28, 1
        %s164 = scalar_lea.sflag [#allocation3], %s163
        %s165 = sand.u32 %s28, 1
        %s166 = smul.addr %s165, 16
        %s167 = scalar_lea.vmem [#allocation2], %s166
        // Predicated region
        $region33: #{tpu_custom_call.1} parent=31 // pred_check
          %p168 = pneg %p41
        $region34: #{tpu_custom_call.1} parent=31 // pred_check_branch
          %170 = sbr.rel (%p168) target = $region36
        $region35: #{tpu_custom_call.1} parent=31 // pred_region
          %171 = dma.done %s164, 256
        $region36: #{tpu_custom_call.1} parent=31 // pred_fallthru
          _
        %s172 = sand.u32 %s28, 1
        %s173 = scalar_lea.sflag [#allocation3], %s172
        %s174 = sand.u32 %s28, 1
        %s175 = smul.addr %s174, 16
        %s176 = scalar_lea.vmem [#allocation2], %s175
        %p177 = pneg %p41
        %p178 = pneg %p38
        %p179 = pneg %p62
        %p180 = pneg %p59
        %p181 = pneg %p83
        %p182 = pneg %p80
        %p183 = pneg %p109
        %p184 = pneg %p106
        %s185 = sand.u32 %s96, 1
        %s186 = scalar_lea.sflag [#allocation4], %s185
        %s187 = sand.u32 %s96, 1
        %s188 = smul.addr %s187, 16
        %s189 = scalar_lea.vmem [#allocation5], %s188
        %s190 = smul.u32 2, %s20
        %s191 = smul.u32 2, %s20
        %v192 = vld [vmem:[%s167] sm:$0xff]
        %v193 = vld [vmem:[%s167 + $0x8] sm:$0xff]
        %v196 = vcombine.high %v192, %v192
        %v197 = vcombine.high %v193, %v193
        %vm200 = vcmask 1043456
        %v201 = vsel %vm200, %v192, 0.0
        %v202 = vsel %vm200, %v196, 0.0
        %v203 = vadd.f32 %v201, %v202
        %204 = vadd.xlane.f32.xlu0 %v203
        %v205 = vpop.xlane.xlu0 %204
        %v206 = vsel %vm200, %v193, 0.0
        %v207 = vsel %vm200, %v197, 0.0
        %v208 = vadd.f32 %v206, %v207
        %209 = vadd.xlane.f32.xlu0 %v208
        %v210 = vpop.xlane.xlu0 %209
        %v211 = vsel %vm200, %v205, 0.0
        %v212 = vsel %vm200, %v210, 0.0
        %v213 = vadd.f32 %v211, %v212
        %v214 = vmul.f32 %v192, %v192
        %v215 = vmul.f32 %v193, %v193
        %v218 = vcombine.high %v214, %v214
        %v219 = vcombine.high %v215, %v215
        %v222 = vsel %vm200, %v214, 0.0
        %v223 = vsel %vm200, %v218, 0.0
        %v224 = vadd.f32 %v222, %v223
        %225 = vadd.xlane.f32.xlu0 %v224
        %v226 = vpop.xlane.xlu0 %225
        %v227 = vsel %vm200, %v215, 0.0
        %v228 = vsel %vm200, %v219, 0.0
        %v229 = vadd.f32 %v227, %v228
        %230 = vadd.xlane.f32.xlu0 %v229
        %v231 = vpop.xlane.xlu0 %230
        %v232 = vsel %vm200, %v226, 0.0
        %v233 = vsel %vm200, %v231, 0.0
        %v234 = vadd.f32 %v232, %v233
        %v235 = vmul.f32 %v213, 0.001953125
        %v236 = vmul.f32 %v234, 0.001953125
        %v237 = vmul.f32 %v235, %v235
        %v238 = vsub.f32 %v236, %v237
        %v239 = vmax.f32 %v238, 0.0
        %v240 = vadd.f32 %v239, 1e-05
        %v241 = vrsqrt.pop %v240
        %v242 = vld [vmem:[%s1] sm:$0xf]
        %v243 = vmul.f32 %v242, %v241
        %v244 = vld [vmem:[%s2] sm:$0xf]
        %v245 = vmul.f32 %v235, %v243
        %v246 = vsub.f32 %v244, %v245
        %248 = vset.pattern.permute.xlu0 0
        %249 = vperm.xlu0 %248, %v243
        %v250 = vpop.permute.xlu0 %249
        %v252 = vunpack.c.l.s4 839922192
        %v253 = vunpack.c.0.s8 %v252
        %v254 = vlaneseq
        %v255 = vshrl.u32 %v254, 7
        %v256 = vsub.s32 %v253, %v255
        %v257 = vrot.slane %v250, %v256
        %v259 = vmul.f32 %v192, %v257
        %v260 = vmul.f32 %v193, %v257
        %262 = vset.pattern.permute.xlu0 0
        %263 = vperm.xlu0 %262, %v246
        %v264 = vpop.permute.xlu0 %263
        %v266 = vunpack.c.l.s4 839922192
        %v267 = vunpack.c.0.s8 %v266
        %v268 = vlaneseq
        %v269 = vshrl.u32 %v268, 7
        %v270 = vsub.s32 %v267, %v269
        %v271 = vrot.slane %v264, %v270
        %v273 = vadd.f32 %v259, %v271
        %v274 = vadd.f32 %v260, %v271
        %275 = vst [vmem:[%s189] sm:$0xff] %v273
        %276 = vst [vmem:[%s189 + $0x8] sm:$0xff] %v274
        %s277 = sand.u32 %s96, 1
        %s278 = scalar_lea.sflag [#allocation4], %s277
        %s279 = sand.u32 %s96, 1
        %s280 = smul.addr %s279, 16
        %s281 = scalar_lea.vmem [#allocation5], %s280
        // Predicated region
        $region37: #{tpu_custom_call.1} parent=31 // pred_check
          %p282 = pneg %p106
        $region38: #{tpu_custom_call.1} parent=31 // pred_check_branch
          %284 = sbr.rel (%p282) target = $region40
        $region39: #{tpu_custom_call.1} parent=31 // pred_region
          %s285 = smul.u32 2, %s20
          %s287 = ssub.s32 256, 256
          %288 = vsyncadd %s278, %s287
          %s289 = smul.addr %s285, 2
          %s290 = smul.addr %s289, 64
          %s291 = scalar_lea.hbm %s3, %s290
          %s292 = sshll.u32 %s281, 4
          %s293 = int_to_ptr.vmem [resolvable:$true] %s292
          %298 = dma.vmem_to_hbm [thread:$0]  %s293, 256, %s291, %s278, 128, 128, 8
        $region40: #{tpu_custom_call.1} parent=31 // pred_fallthru
          _
      $region32: #{tpu_custom_call.1} parent=5 // pred_fallthru
        _
      %p299 = scmp.le.s32.totalorder 2, %s15
      // Predicated region
      $region41: #{tpu_custom_call.1} parent=5 // pred_check
        %p300 = pneg %p299
      $region42: #{tpu_custom_call.1} parent=5 // pred_check_branch
        %302 = sbr.rel (%p300) target = $region44
      $region43: #{tpu_custom_call.1} parent=5 // pred_region
        %s303 = ssub.s32 %s15, 2
        // Predicated region
        $region45: #{tpu_custom_call.1} parent=43 // pred_check
          %p304 = pneg %p112
        $region46: #{tpu_custom_call.1} parent=43 // pred_check_branch
          %306 = sbr.rel (%p304) target = $region48
        $region47: #{tpu_custom_call.1} parent=43 // pred_region
          %s307 = sand.u32 %s97, 1
          %s308 = scalar_lea.sflag [#allocation4], %s307
          %s309 = sand.u32 %s97, 1
          %s310 = smul.addr %s309, 16
          %s311 = scalar_lea.vmem [#allocation5], %s310
          %312 = dma.done %s308, 256
        $region48: #{tpu_custom_call.1} parent=43 // pred_fallthru
          _
      $region44: #{tpu_custom_call.1} parent=5 // pred_fallthru
        _
    $region6: #{tpu_custom_call.1} parent=1 // loop_footer
      %s19 = sadd.s32 1, %s15
    $region7: #{tpu_custom_call.1} parent=1 // loop_footer_branch
      %14 = sbr.rel target = $region3
    $region8: #{tpu_custom_call.1} parent=1 // loop_exit
      _
    %313 = vsyncpa [#allocation3], 1
    %s314 = scalar_lea.sflag [#allocation3], 1
    %315 = vsyncpa %s314, 1
    %316 = vsyncpa [#allocation4], 1
    %s317 = scalar_lea.sflag [#allocation4], 1
    %318 = vsyncpa %s317, 1

</llo_original>
